<compile_context>
chip_gen: v7x
topology: tpu7x:2x2x1
jax: 0.10.0
libtpu: 0.0.40
codegen_flags: <defaults>
</compile_context>

<pallas_src>
import functools

import jax
import jax.numpy as jnp
from jax.experimental import pallas as pl
from jax.experimental.pallas import tpu as pltpu

SCALING = 0.2        # LeakyReLU negative slope
APPLY_ACT = False    # module default
NEG_INF = -1e30


def _round_up(x, m):
    return ((x + m - 1) // m) * m


# --------------------------------------------------------------------------
# Stage 1: node transform  h_ext = x @ Wt_ext + b_ext    (grid over node blocks)
#   Wt_ext / b_ext carry h, u (= h·a_i + b_a) and v (= h·a_j) in their lanes.
# --------------------------------------------------------------------------
def _transform_kernel(x_ref, wt_ref, bw_ref, h_ref):
    h_ref[...] = (
        jnp.dot(x_ref[...], wt_ref[...], preferred_element_type=jnp.float32)
        + bw_ref[...]
    )


# --------------------------------------------------------------------------
# Stage 2: per-edge source gather           grid = (edge blocks, node blocks)
#   h_src[e] += onehot(src[e], node_blk) @ h_blk           (node axis reduced)
#   v_src[e] += v[src[e]]   emitted as a lane-dense (1, E) row
# --------------------------------------------------------------------------
def _gather_kernel(src_col_ref, src_row_ref, h_ref, hsrc_ref, vsrc_ref, *, v_lane):
    k = pl.program_id(1)                     # node-block (reduction) step

    @pl.when(k == 0)
    def _():
        hsrc_ref[...] = jnp.zeros_like(hsrc_ref)
        vsrc_ref[...] = jnp.zeros_like(vsrc_ref)

    te = src_col_ref.shape[0]
    tnk, h_pad = h_ref.shape
    base = k * tnk
    h_blk = h_ref[...]

    # (te, tnk) one-hot: edge e selects its source node (padded edges src=-1 -> zero row)
    col = base + jax.lax.broadcasted_iota(jnp.int32, (te, tnk), 1)
    sel = (col == src_col_ref[...]).astype(jnp.float32)
    hsrc_ref[...] += jnp.dot(sel, h_blk, preferred_element_type=jnp.float32)

    # per-node source-side score v (lane v_lane of h) -> lane-dense (1, te) row
    vmask = jax.lax.broadcasted_iota(jnp.int32, (1, h_pad), 1) == v_lane
    v_nodes = jnp.sum(jnp.where(vmask, h_blk, 0.0), axis=1, keepdims=True)   # (tnk, 1)
    row = base + jax.lax.broadcasted_iota(jnp.int32, (tnk, te), 0)
    sel_t = (row == src_row_ref[...]).astype(jnp.float32)                    # (tnk, te)
    vsrc_ref[...] += jnp.sum(v_nodes * sel_t, axis=0, keepdims=True)


# --------------------------------------------------------------------------
# Stage 3: masked segment softmax + aggregation + skip
#          grid = (node blocks [parallel], edge blocks [arbitrary reduction])
#   online softmax over streamed edge tiles with (m, l, acc) scratch carry
# --------------------------------------------------------------------------
def _attend_kernel(h_ref, hsrc_ref, vsrc_ref, tgt_ref, out_ref,
                   m_sc, l_sc, acc_sc, *, u_lane):
    n_blk = pl.program_id(0)
    e_step = pl.program_id(1)
    tn, h_pad = h_ref.shape

    @pl.when(e_step == 0)
    def _():
        m_sc[...] = jnp.full_like(m_sc, NEG_INF)
        l_sc[...] = jnp.zeros_like(l_sc)
        acc_sc[...] = jnp.zeros_like(acc_sc)

    h_blk = h_ref[...]

    # u[n] = h[n]·a_i + b_a  lives in lane u_lane of h  ->  (tn, 1)
    umask = jax.lax.broadcasted_iota(jnp.int32, (1, h_pad), 1) == u_lane
    u = jnp.sum(jnp.where(umask, h_blk, 0.0), axis=1, keepdims=True)

    # target mask from a (tn, 1) node-id column vs the (1, te) tgt row
    node_id = n_blk * tn + jax.lax.broadcasted_iota(jnp.int32, (tn, 1), 0)
    is_tgt = node_id == tgt_ref[...]                                    # (tn, te)

    logits = u + vsrc_ref[...]
    logits = jnp.where(logits > 0, logits, SCALING * logits)            # LeakyReLU
    masked = jnp.where(is_tgt, logits, NEG_INF)

    m_prev = m_sc[...]
    m_new = jnp.maximum(m_prev, jnp.max(masked, axis=-1, keepdims=True))
    scale = jnp.exp(m_prev - m_new)                                     # EUP
    p = jnp.where(is_tgt, jnp.exp(masked - m_new), 0.0)                 # EUP

    l_sc[...] = scale * l_sc[...] + jnp.sum(p, axis=-1, keepdims=True)
    acc_sc[...] = scale * acc_sc[...] + jnp.dot(
        p, hsrc_ref[...], preferred_element_type=jnp.float32)
    m_sc[...] = m_new

    @pl.when(e_step == pl.num_programs(1) - 1)
    def _():
        l = l_sc[...]
        inv = jnp.where(l > 0, pl.reciprocal(l, approx=True), 0.0)      # EUP
        out = acc_sc[...] * inv + h_blk                                 # skip connection
        if APPLY_ACT:  # ELU
            out = jnp.where(out > 0, out, jnp.exp(out) - 1.0)
        out_ref[...] = out


# --------------------------------------------------------------------------
# Wrapper
# --------------------------------------------------------------------------
def gat_skip_forward(node_features, edge_index, params, *,
                     node_block=128, edge_block=512):
    N, F = node_features.shape
    E = edge_index.shape[1]
    H = params["w"].shape[0]
    f32 = jnp.float32

    # padded sizes; 2 extra lanes carry the folded attention projections u / v
    h_pad = _round_up(H + 2, 128)
    u_lane, v_lane = H, H + 1
    f_pad = _round_up(F, 128)

    tn = _round_up(min(node_block, N), 8)          # node tile (sublane multiple)
    n_pad = _round_up(N, tn)
    te = _round_up(min(edge_block, E), 128)        # edge tile (lane multiple)
    e_pad = _round_up(E, te)

    # ---- fold a_i / a_j / b_a into the stage-1 weights -------------------
    w = params["w"].astype(f32)                    # (H, F)
    b_w = params["b_w"].astype(f32)                # (H,)
    a = params["a"].reshape(-1).astype(f32)
    a_i, a_j = a[:H], a[H:]
    b_a = params["b_a"].reshape(()).astype(f32)

    wt = jnp.zeros((f_pad, h_pad), f32)
    wt = wt.at[:F, :H].set(w.T)
    wt = wt.at[:F, u_lane].set(w.T @ a_i)
    wt = wt.at[:F, v_lane].set(w.T @ a_j)

    bw = jnp.zeros((1, h_pad), f32)
    bw = bw.at[0, :H].set(b_w)
    bw = bw.at[0, u_lane].set(jnp.dot(b_w, a_i) + b_a)
    bw = bw.at[0, v_lane].set(jnp.dot(b_w, a_j))

    x = jnp.zeros((n_pad, f_pad), f32).at[:N, :F].set(node_features.astype(f32))

    pad_e = e_pad - E
    tgt = jnp.concatenate([edge_index[0].astype(jnp.int32),
                           jnp.full((pad_e,), -1, jnp.int32)])
    src = jnp.concatenate([edge_index[1].astype(jnp.int32),
                           jnp.full((pad_e,), -1, jnp.int32)])
    tgt_row = tgt.reshape(1, e_pad)
    src_row = src.reshape(1, e_pad)
    src_col = src.reshape(e_pad, 1)

    vmem_cap = 48 * 1024 * 1024                    # headroom on v7x 64 MiB VMEM
    cp1 = pltpu.CompilerParams(dimension_semantics=("parallel",),
                               vmem_limit_bytes=vmem_cap)
    cp2 = pltpu.CompilerParams(dimension_semantics=("parallel", "arbitrary"),
                               vmem_limit_bytes=vmem_cap)

    # ---- stage 1: h_ext = x @ Wt_ext + b_ext ------------------------------
    h = pl.pallas_call(
        _transform_kernel,
        out_shape=jax.ShapeDtypeStruct((n_pad, h_pad), f32),
        grid=(n_pad // tn,),
        in_specs=[pl.BlockSpec((tn, f_pad), lambda i: (i, 0)),
                  pl.BlockSpec((f_pad, h_pad), lambda i: (0, 0)),
                  pl.BlockSpec((1, h_pad), lambda i: (0, 0))],
        out_specs=pl.BlockSpec((tn, h_pad), lambda i: (i, 0)),
        compiler_params=cp1,
    )(x, wt, bw)

    # ---- stage 2: gather h[src] (+ v[src]) with a tiled node reduction ----
    h_src, v_src = pl.pallas_call(
        functools.partial(_gather_kernel, v_lane=v_lane),
        out_shape=(jax.ShapeDtypeStruct((e_pad, h_pad), f32),
                   jax.ShapeDtypeStruct((1, e_pad), f32)),
        grid=(e_pad // te, n_pad // tn),
        in_specs=[pl.BlockSpec((te, 1), lambda e, k: (e, 0)),
                  pl.BlockSpec((1, te), lambda e, k: (0, e)),
                  pl.BlockSpec((tn, h_pad), lambda e, k: (k, 0))],
        out_specs=(pl.BlockSpec((te, h_pad), lambda e, k: (e, 0)),
                   pl.BlockSpec((1, te), lambda e, k: (0, e))),
        compiler_params=cp2,
    )(src_col, src_row, h)

    # ---- stage 3: online segment-softmax + aggregate + skip ---------------
    out = pl.pallas_call(
        functools.partial(_attend_kernel, u_lane=u_lane),
        out_shape=jax.ShapeDtypeStruct((n_pad, h_pad), f32),
        grid=(n_pad // tn, e_pad // te),
        in_specs=[pl.BlockSpec((tn, h_pad), lambda i, e: (i, 0)),
                  pl.BlockSpec((te, h_pad), lambda i, e: (e, 0)),
                  pl.BlockSpec((1, te), lambda i, e: (0, e)),
                  pl.BlockSpec((1, te), lambda i, e: (0, e))],
        out_specs=pl.BlockSpec((tn, h_pad), lambda i, e: (i, 0)),
        scratch_shapes=[pltpu.VMEM((tn, 1), f32),       # running max m
                        pltpu.VMEM((tn, 1), f32),       # running denom l
                        pltpu.VMEM((tn, h_pad), f32)],  # running numerator acc
        compiler_params=cp2,
    )(h, h_src, v_src, tgt_row)

    return out[:N, :H]


# --------------------------------------------------------------------------
# Parameter init + pure-JAX reference (mirrors the PyTorch module, eval mode)
# --------------------------------------------------------------------------
def init_params(key, n_node_features, n_hidden_features):
    k1, k2, k3, k4 = jax.random.split(key, 4)
    kw = 1.0 / jnp.sqrt(jnp.float32(n_node_features))
    ka = 1.0 / jnp.sqrt(jnp.float32(2 * n_hidden_features))
    return {
        "w":   jax.random.uniform(k1, (n_hidden_features, n_node_features),
                                  jnp.float32, -kw, kw),
        "b_w": jax.random.uniform(k2, (n_hidden_features,), jnp.float32, -kw, kw),
        "a":   jax.random.uniform(k3, (1, 2 * n_hidden_features),
                                  jnp.float32, -ka, ka),
        "b_a": jax.random.uniform(k4, (1,), jnp.float32, -ka, ka),
    }


def reference_forward(node_features, edge_index, params):
    h = node_features @ params["w"].T + params["b_w"]
    tgt, src = edge_index[0], edge_index[1]
    h_i, h_j = h[tgt], h[src]
    e = jnp.concatenate([h_i, h_j], -1) @ params["a"].T + params["b_a"]
    e = jnp.where(e > 0, e, SCALING * e)[:, 0]
    N = node_features.shape[0]
    m = jax.ops.segment_max(e, tgt, num_segments=N)
    exp_e = jnp.exp(e - m[tgt])
    denom = jax.ops.segment_sum(exp_e, tgt, num_segments=N)
    alpha = (exp_e / denom[tgt])[:, None]
    out = jax.ops.segment_sum(alpha * h_j, tgt, num_segments=N) + h
    if APPLY_ACT:
        out = jnp.where(out > 0, out, jnp.exp(out) - 1.0)
    return out


if __name__ == "__main__":
    N_NODES, N_FEATURES, N_HIDDEN, N_EDGES = 16, 8, 32, 300

    key = jax.random.PRNGKey(0)
    kx, kt, ks, kp = jax.random.split(key, 4)
    node_features = jax.random.normal(kx, (N_NODES, N_FEATURES), jnp.float32)
    edge_index = jnp.stack([
        jax.random.randint(kt, (N_EDGES,), 0, N_NODES),   # targets
        jax.random.randint(ks, (N_EDGES,), 0, N_NODES),   # sources
    ], axis=0).astype(jnp.int32)
    params = init_params(kp, N_FEATURES, N_HIDDEN)

    # small blocks so the demo exercises the multi-block node + edge grids
    out = gat_skip_forward(node_features, edge_index, params,
                           node_block=8, edge_block=128)
    out = jax.block_until_ready(out)

    ref = reference_forward(node_features, edge_index, params)
    assert out.shape == (N_NODES, N_HIDDEN)
    assert jnp.allclose(out, ref, rtol=2e-3, atol=2e-3), "mismatch vs reference"
    print("KERNEL_OK")
</pallas_src>

<mosaic_0001>
module attributes {stable_mosaic.version = 11 : i64} {
  func.func @_transform_kernel(%arg0: i32, %arg1: memref<8x128xf32, #tpu.memory_space<vmem>>, %arg2: memref<128x128xf32, #tpu.memory_space<vmem>>, %arg3: memref<1x128xf32, #tpu.memory_space<vmem>>, %arg4: memref<8x128xf32, #tpu.memory_space<vmem>>) attributes {dimension_semantics = [#tpu.dimension_semantics<parallel>], iteration_bounds = array<i64: 2>, scalar_prefetch = 0 : i64, scratch_operands = 0 : i64, tpu.core_type = #tpu.core_type<tc>, window_params = [{transform_indices = @transform_0, window_bounds = array<i64: 8, 128>}, {pipeline_mode = #tpu.pipeline_mode<synchronous>, transform_indices = @transform_1, window_bounds = array<i64: 128, 128>}, {pipeline_mode = #tpu.pipeline_mode<synchronous>, transform_indices = @transform_2, window_bounds = array<i64: 1, 128>}, {transform_indices = @transform_3, window_bounds = array<i64: 8, 128>}]} {
    %c0 = arith.constant 0 : index
    %c0_0 = arith.constant 0 : index
    %0 = vector.load %arg1[%c0, %c0_0] : memref<8x128xf32, #tpu.memory_space<vmem>>, vector<8x128xf32>
    %c0_1 = arith.constant 0 : index
    %c0_2 = arith.constant 0 : index
    %1 = vector.load %arg2[%c0_1, %c0_2] : memref<128x128xf32, #tpu.memory_space<vmem>>, vector<128x128xf32>
    %cst = arith.constant dense<0.000000e+00> : vector<8x128xf32>
    %2 = tpu.matmul %0, %1, %cst {dimension_numbers = #tpu.dot_dimension_numbers<[1], [0], [0], [1], [0, 0, 1, 1], [], []>} : vector<8x128xf32>, vector<128x128xf32>, vector<8x128xf32> -> vector<8x128xf32>
    %c0_3 = arith.constant 0 : index
    %c0_4 = arith.constant 0 : index
    %3 = vector.load %arg3[%c0_3, %c0_4] : memref<1x128xf32, #tpu.memory_space<vmem>>, vector<1x128xf32>
    %4 = vector.broadcast %3 : vector<1x128xf32> to vector<8x128xf32>
    %5 = arith.addf %2, %4 : vector<8x128xf32>
    %c0_5 = arith.constant 0 : index
    %c0_6 = arith.constant 0 : index
    %6 = vector.load %arg4[%c0_5, %c0_6] : memref<8x128xf32, #tpu.memory_space<vmem>>, vector<8x128xf32>
    tpu.vector_store %arg4[%c0_5, %c0_6], %5 {strides = array<i32>} : memref<8x128xf32, #tpu.memory_space<vmem>>, vector<8x128xf32>,
    return
  }
  func.func @transform_0(%arg0: i32) -> (i32, i32) {
    %c0_i32 = arith.constant 0 : i32
    %c0_i32_0 = arith.constant 0 : i32
    return %arg0, %c0_i32 : i32, i32
  }
  func.func @transform_1(%arg0: i32) -> (i32, i32) {
    %c0_i32 = arith.constant 0 : i32
    %c0_i32_0 = arith.constant 0 : i32
    %c0_i32_1 = arith.constant 0 : i32
    return %c0_i32, %c0_i32_0 : i32, i32
  }
  func.func @transform_2(%arg0: i32) -> (i32, i32) {
    %c0_i32 = arith.constant 0 : i32
    %c0_i32_0 = arith.constant 0 : i32
    %c0_i32_1 = arith.constant 0 : i32
    return %c0_i32, %c0_i32_0 : i32, i32
  }
  func.func @transform_3(%arg0: i32) -> (i32, i32) {
    %c0_i32 = arith.constant 0 : i32
    %c0_i32_0 = arith.constant 0 : i32
    return %arg0, %c0_i32 : i32, i32
  }
}

</mosaic_0001>

<llo_original>
// kernel: tpu_custom_call.1
$region0: #{tpu_custom_call.1}
  #allocation0 [shape = 'u32[]', space=smem, size = 0x4, offset = 0x4, fixed_abs, tag = 'smem constant byte address 0x4 - core index']
  #allocation1 [shape = 'u32[144,128]{1,0:T(1,128)}', space=vmem, size = 0x12000, scoped, tag = 'internal scratch']
  %s0 = inlined_call_operand.hbm [shape: f32[16,128], index: 0, kind: input, shape index: {}]
  %s1 = inlined_call_operand.hbm [shape: f32[128,128], index: 1, kind: input, shape index: {}]
  %s2 = inlined_call_operand.vmem [shape: f32[1,128], index: 2, kind: input, shape index: {}]
  %s3 = inlined_call_operand.hbm [shape: f32[16,128], index: 3, kind: output, shape index: {}]
  %s4 = sld [smem:[#allocation0]]
  $region53: #{tpu_custom_call.1} parent=0
    _
  %s6 = ssub.s32 1, %s4
  %s7 = scalar_select 0, %s6, %s4
  $region1: #{tpu_custom_call.1} parent=0
    #allocation2 [shape = 'u8[8192]{0}', space=vmem, size = 0x2000, scoped, tag = 'input window, operand 0']
    #allocation3 [shape = 's32[2]{0}', space=sflag, size = 0x8, scoped, tag = 'scoped memory for tpu_custom_call.1']
    #allocation4 [shape = 's32[2]{0}', space=sflag, size = 0x8, scoped, tag = 'scoped memory for tpu_custom_call.1']
    #allocation5 [shape = 'u8[65536]{0}', space=vmem, size = 0x10000, scoped, tag = 'input window, operand 1, single buffered']
    #allocation6 [shape = 's32[1]{0}', space=sflag, size = 0x4, scoped, tag = 'scoped memory for tpu_custom_call.1']
    #allocation7 [shape = 'u8[8192]{0}', space=vmem, size = 0x2000, scoped, tag = 'output window, operand 0']
    %8 = vsyncpa [#allocation3], 0
    %s9 = scalar_lea.sflag [#allocation3], 1
    %10 = vsyncpa %s9, 0
    %11 = vsyncpa [#allocation6], 0
    %12 = vsyncpa [#allocation4], 0
    %s13 = scalar_lea.sflag [#allocation4], 1
    %14 = vsyncpa %s13, 0
    loop: start=0, step=1, limit=4
    $region2: #{tpu_custom_call.1} parent=1 // loop_pre_header
      _
    $region3: #{tpu_custom_call.1} parent=1 // loop_header
      %s16 = sphi 0, %s20
      %p17 = scmp.ge.s32.totalorder %s16, 4
      %s26 = sphi 0, %s28
      %s29 = sphi 0, %s26
      %s30 = sphi 0, %s29
      %s46 = sphi 0, %s30
      %s50 = sphi 0, %s50
      %s52 = sphi 0, %s50
      %s53 = sphi 0, %s52
      %s67 = sphi 0, %s53
      %s71 = sphi 0, %s71
      %s73 = sphi 0, %s71
      %s74 = sphi 0, %s73
      %s88 = sphi 0, %s74
      %s94 = sphi 0, %s96
      %s97 = sphi 0, %s94
      %s98 = sphi 0, %s97
      %s114 = sphi 0, %s98
    $region4: #{tpu_custom_call.1} parent=1 // loop_header_branch
      %19 = sbr.rel (%p17) target = $region8
    $region5: #{tpu_custom_call.1} parent=1 // loop_body
      %s21 = ssub.s32 %s16, 1
      %s22 = ssub.s32 %s16, 2
      %s23 = sadd.s32 %s16, 1
      %s24 = ssub.s32 %s16, %s23
      %p25 = scmp.eq.s32.totalorder %s24, 0
      %s27 = sadd.s32 %s26, 1
      %s28 = scalar_select %p25, %s26, %s27
      %p31 = pneg %p25
      %p32 = scmp.eq.s32.totalorder %s16, 1
      %p33 = por %p31, %p32
      %p34 = scmp.ne.s32.totalorder %s26, %s29
      %p35 = scmp.eq.s32.totalorder %s16, 0
      %p36 = por %p34, %p35
      %p37 = scmp.ne.s32.totalorder %s26, %s29
      %p38 = scmp.eq.s32.totalorder %s21, 1
      %p39 = por %p37, %p38
      %p40 = scmp.ne.s32.totalorder %s29, %s30
      %p41 = scmp.eq.s32.totalorder %s21, 0
      %p42 = por %p40, %p41
      %p43 = scmp.ne.s32.totalorder %s29, %s30
      %p44 = scmp.eq.s32.totalorder %s22, 1
      %p45 = por %p43, %p44
      %p47 = scmp.ne.s32.totalorder %s30, %s46
      %p48 = scmp.eq.s32.totalorder %s22, 0
      %p49 = por %p47, %p48
      %s51 = sadd.s32 %s50, 1
      %p54 = scmp.eq.s32.totalorder %s16, 1
      %p55 = scmp.ne.s32.totalorder %s50, %s52
      %p56 = scmp.eq.s32.totalorder %s16, 0
      %p57 = por %p55, %p56
      %p58 = scmp.ne.s32.totalorder %s50, %s52
      %p59 = scmp.eq.s32.totalorder %s21, 1
      %p60 = por %p58, %p59
      %p61 = scmp.ne.s32.totalorder %s52, %s53
      %p62 = scmp.eq.s32.totalorder %s21, 0
      %p63 = por %p61, %p62
      %p64 = scmp.ne.s32.totalorder %s52, %s53
      %p65 = scmp.eq.s32.totalorder %s22, 1
      %p66 = por %p64, %p65
      %p68 = scmp.ne.s32.totalorder %s53, %s67
      %p69 = scmp.eq.s32.totalorder %s22, 0
      %p70 = por %p68, %p69
      %s72 = sadd.s32 %s71, 1
      %p75 = scmp.eq.s32.totalorder %s16, 1
      %p76 = scmp.ne.s32.totalorder %s71, %s73
      %p77 = scmp.eq.s32.totalorder %s16, 0
      %p78 = por %p76, %p77
      %p79 = scmp.ne.s32.totalorder %s71, %s73
      %p80 = scmp.eq.s32.totalorder %s21, 1
      %p81 = por %p79, %p80
      %p82 = scmp.ne.s32.totalorder %s73, %s74
      %p83 = scmp.eq.s32.totalorder %s21, 0
      %p84 = por %p82, %p83
      %p85 = scmp.ne.s32.totalorder %s73, %s74
      %p86 = scmp.eq.s32.totalorder %s22, 1
      %p87 = por %p85, %p86
      %p89 = scmp.ne.s32.totalorder %s74, %s88
      %p90 = scmp.eq.s32.totalorder %s22, 0
      %p91 = por %p89, %p90
      %s92 = ssub.s32 %s16, %s23
      %p93 = scmp.eq.s32.totalorder %s92, 0
      %s95 = sadd.s32 %s94, 1
      %s96 = scalar_select %p93, %s94, %s95
      %p99 = pneg %p93
      %p100 = scmp.eq.s32.totalorder %s16, 1
      %p101 = por %p99, %p100
      %p102 = scmp.ne.s32.totalorder %s94, %s97
      %p103 = scmp.eq.s32.totalorder %s16, 0
      %p104 = por %p102, %p103
      %p105 = scmp.ne.s32.totalorder %s94, %s97
      %p106 = scmp.eq.s32.totalorder %s21, 1
      %p107 = por %p105, %p106
      %p108 = scmp.ne.s32.totalorder %s97, %s98
      %p109 = scmp.eq.s32.totalorder %s21, 0
      %p110 = por %p108, %p109
      %p111 = scmp.ne.s32.totalorder %s97, %s98
      %p112 = scmp.eq.s32.totalorder %s22, 1
      %p113 = por %p111, %p112
      %p115 = scmp.ne.s32.totalorder %s98, %s114
      %p116 = scmp.eq.s32.totalorder %s22, 0
      %p117 = por %p115, %p116
      %p118 = scmp.le.s32.totalorder 1, %s16
      %p119 = scmp.lt.s32.totalorder %s16, 3
      %p120 = pnand %p118, %p119
      %p121 = pneg %p120
      // Predicated region
      $region9: #{tpu_custom_call.1} parent=5 // pred_check
        _
      $region10: #{tpu_custom_call.1} parent=5 // pred_check_branch
        %123 = sbr.rel (%p120) target = $region12
      $region11: #{tpu_custom_call.1} parent=5 // pred_region
        %s124 = ssub.s32 %s16, 1
        // Predicated region
        $region13: #{tpu_custom_call.1} parent=11 // pred_check
          %p125 = pneg %p63
        $region14: #{tpu_custom_call.1} parent=11 // pred_check_branch
          %127 = sbr.rel (%p125) target = $region16
        $region15: #{tpu_custom_call.1} parent=11 // pred_region
          %s129 = ssub.s32 2048, 2048
          %130 = vsyncadd [#allocation6], %s129
          %s131 = sshll.u32 [#allocation5], 4
          %s132 = int_to_ptr.vmem [resolvable:$true] %s131
          %137 = dma.hbm_to_vmem [thread:$0]  %s1, 2048, %s132, [#allocation6], 128, 128, 8
        $region16: #{tpu_custom_call.1} parent=11 // pred_fallthru
          _
        // Predicated region
        $region17: #{tpu_custom_call.1} parent=11 // pred_check
          %p138 = pneg %p84
        $region18: #{tpu_custom_call.1} parent=11 // pred_check_branch
          %140 = sbr.rel (%p138) target = $region20
        $region19: #{tpu_custom_call.1} parent=11 // pred_region
          _
        $region20: #{tpu_custom_call.1} parent=11 // pred_fallthru
          _
      $region12: #{tpu_custom_call.1} parent=5 // pred_fallthru
        _
      %p141 = scmp.lt.s32.totalorder %s16, 2
      // Predicated region
      $region21: #{tpu_custom_call.1} parent=5 // pred_check
        %p142 = pneg %p141
      $region22: #{tpu_custom_call.1} parent=5 // pred_check_branch
        %144 = sbr.rel (%p142) target = $region24
      $region23: #{tpu_custom_call.1} parent=5 // pred_region
        // Predicated region
        $region25: #{tpu_custom_call.1} parent=23 // pred_check
          %p145 = pneg %p36
        $region26: #{tpu_custom_call.1} parent=23 // pred_check_branch
          %147 = sbr.rel (%p145) target = $region28
        $region27: #{tpu_custom_call.1} parent=23 // pred_region
          %s148 = sand.u32 %s26, 1
          %s149 = scalar_lea.sflag [#allocation3], %s148
          %s150 = sand.u32 %s26, 1
          %s151 = smul.addr %s150, 8
          %s152 = scalar_lea.vmem [#allocation2], %s151
          %s154 = ssub.s32 128, 128
          %155 = vsyncadd %s149, %s154
          %s156 = smul.addr %s16, 128
          %s157 = scalar_lea.hbm %s0, %s156
          %s159 = sshll.u32 %s152, 4
          %s160 = int_to_ptr.vmem [resolvable:$true] %s159
          %162 = dma.hbm_to_vmem [thread:$0]  %s157, 128, %s160, %s149
        $region28: #{tpu_custom_call.1} parent=23 // pred_fallthru
          _
      $region24: #{tpu_custom_call.1} parent=5 // pred_fallthru
        _
      %p163 = scmp.le.s32.totalorder 1, %s16
      %p164 = scmp.lt.s32.totalorder %s16, 3
      %p165 = pnand %p163, %p164
      %p166 = pneg %p165
      // Predicated region
      $region29: #{tpu_custom_call.1} parent=5 // pred_check
        _
      $region30: #{tpu_custom_call.1} parent=5 // pred_check_branch
        %168 = sbr.rel (%p165) target = $region32
      $region31: #{tpu_custom_call.1} parent=5 // pred_region
        %s169 = ssub.s32 %s16, 1
        %s170 = sand.u32 %s29, 1
        %s171 = scalar_lea.sflag [#allocation3], %s170
        %s172 = sand.u32 %s29, 1
        %s173 = smul.addr %s172, 8
        %s174 = scalar_lea.vmem [#allocation2], %s173
        // Predicated region
        $region33: #{tpu_custom_call.1} parent=31 // pred_check
          %p175 = pneg %p42
        $region34: #{tpu_custom_call.1} parent=31 // pred_check_branch
          %177 = sbr.rel (%p175) target = $region36
        $region35: #{tpu_custom_call.1} parent=31 // pred_region
          %178 = dma.done %s171, 128
        $region36: #{tpu_custom_call.1} parent=31 // pred_fallthru
          _
        // Predicated region
        $region37: #{tpu_custom_call.1} parent=31 // pred_check
          %p179 = pneg %p63
        $region38: #{tpu_custom_call.1} parent=31 // pred_check_branch
          %181 = sbr.rel (%p179) target = $region40
        $region39: #{tpu_custom_call.1} parent=31 // pred_region
          %182 = dma.done [#allocation6], 2048
        $region40: #{tpu_custom_call.1} parent=31 // pred_fallthru
          _
        %s183 = sand.u32 %s29, 1
        %s184 = scalar_lea.sflag [#allocation3], %s183
        %s185 = sand.u32 %s29, 1
        %s186 = smul.addr %s185, 8
        %s187 = scalar_lea.vmem [#allocation2], %s186
        %p188 = pneg %p42
        %p189 = pneg %p39
        %p190 = pneg %p63
        %p191 = pneg %p60
        %p192 = pneg %p84
        %p193 = pneg %p81
        %p194 = pneg %p110
        %p195 = pneg %p107
        %s196 = sand.u32 %s97, 1
        %s197 = scalar_lea.sflag [#allocation4], %s196
        %s198 = sand.u32 %s97, 1
        %s199 = smul.addr %s198, 8
        %s200 = scalar_lea.vmem [#allocation7], %s199
        %v201 = vld [vmem:[%s174] sm:$0xff]
        %v202 = vld [vmem:[#allocation5] sm:$0xff]
        %v203 = vld [vmem:[#allocation5 + $0x8] sm:$0xff]
        %v204 = vld [vmem:[#allocation5 + $0x10] sm:$0xff]
        %v205 = vld [vmem:[#allocation5 + $0x18] sm:$0xff]
        %v206 = vld [vmem:[#allocation5 + $0x20] sm:$0xff]
        %v207 = vld [vmem:[#allocation5 + $0x28] sm:$0xff]
        %v208 = vld [vmem:[#allocation5 + $0x30] sm:$0xff]
        %v209 = vld [vmem:[#allocation5 + $0x38] sm:$0xff]
        %v210 = vld [vmem:[#allocation5 + $0x40] sm:$0xff]
        %v211 = vld [vmem:[#allocation5 + $0x48] sm:$0xff]
        %v212 = vld [vmem:[#allocation5 + $0x50] sm:$0xff]
        %v213 = vld [vmem:[#allocation5 + $0x58] sm:$0xff]
        %v214 = vld [vmem:[#allocation5 + $0x60] sm:$0xff]
        %v215 = vld [vmem:[#allocation5 + $0x68] sm:$0xff]
        %v216 = vld [vmem:[#allocation5 + $0x70] sm:$0xff]
        %v217 = vld [vmem:[#allocation5 + $0x78] sm:$0xff]
        %v218 = vld [vmem:[%s2] sm:$0x1]
        %v220 = vlaneseq
        %v221 = vshrl.u32 %v220, 7
        %v222 = vsub.s32 0, %v221
        %v223 = vrot.slane %v218, %v222
        %225 = vmatprep.subr.mxu0 0.0
        %226 = vmatpush1.msra.mxu0 %v202
        %227 = vmatprep.subr.mxu0 0.0
        %228 = vmatpush1.msra.mxu0 %v203
        %229 = vmatprep.subr.mxu0 0.0
        %230 = vmatpush1.msra.mxu0 %v204
        %231 = vmatprep.subr.mxu0 0.0
        %232 = vmatpush1.msra.mxu0 %v205
        %233 = vmatprep.subr.mxu0 0.0
        %234 = vmatpush1.msra.mxu0 %v206
        %235 = vmatprep.subr.mxu0 0.0
        %236 = vmatpush1.msra.mxu0 %v207
        %237 = vmatprep.subr.mxu0 0.0
        %238 = vmatpush1.msra.mxu0 %v208
        %239 = vmatprep.subr.mxu0 0.0
        %240 = vmatpush1.msra.mxu0 %v209
        %241 = vmatprep.subr.mxu0 0.0
        %242 = vmatpush1.msra.mxu0 %v210
        %243 = vmatprep.subr.mxu0 0.0
        %244 = vmatpush1.msra.mxu0 %v211
        %245 = vmatprep.subr.mxu0 0.0
        %246 = vmatpush1.msra.mxu0 %v212
        %247 = vmatprep.subr.mxu0 0.0
        %248 = vmatpush1.msra.mxu0 %v213
        %249 = vmatprep.subr.mxu0 0.0
        %250 = vmatpush1.msra.mxu0 %v214
        %251 = vmatprep.subr.mxu0 0.0
        %252 = vmatpush1.msra.mxu0 %v215
        %253 = vmatprep.subr.mxu0 0.0
        %254 = vmatpush1.msra.mxu0 %v216
        %255 = vmatprep.subr.mxu0 0.0
        %256 = vmatpush1.msra.mxu0 %v217
        %257 = vmatprep.subr.mxu0 0.0
        %258 = vmatpush1.msra.mxu0 0.0
        %259 = vmatprep.subr.mxu0 0.0
        %260 = vmatpush1.msra.mxu0 0.0
        %261 = vmatprep.subr.mxu0 0.0
        %262 = vmatpush1.msra.mxu0 0.0
        %263 = vmatprep.subr.mxu0 0.0
        %264 = vmatpush1.msra.mxu0 0.0
        %265 = vmatprep.subr.mxu0 0.0
        %266 = vmatpush1.msra.mxu0 0.0
        %267 = vmatprep.subr.mxu0 0.0
        %268 = vmatpush1.msra.mxu0 0.0
        %269 = vmatprep.subr.mxu0 0.0
        %270 = vmatpush1.msra.mxu0 0.0
        %271 = vmatprep.subr.mxu0 0.0
        %272 = vmatpush1.msra.mxu0 0.0
        %273 = vmatprep.subr.mxu0 0.0
        %274 = vmatpush1.msra.mxu0 0.0
        %275 = vmatprep.subr.mxu0 0.0
        %276 = vmatpush1.msra.mxu0 0.0
        %277 = vmatprep.subr.mxu0 0.0
        %278 = vmatpush1.msra.mxu0 0.0
        %279 = vmatprep.subr.mxu0 0.0
        %280 = vmatpush1.msra.mxu0 0.0
        %281 = vmatprep.subr.mxu0 0.0
        %282 = vmatpush1.msra.mxu0 0.0
        %283 = vmatprep.subr.mxu0 0.0
        %284 = vmatpush1.msra.mxu0 0.0
        %285 = vmatprep.subr.mxu0 0.0
        %286 = vmatpush1.msra.mxu0 0.0
        %287 = vmatprep.subr.mxu0 0.0
        %288 = vmatpush1.msra.mxu0 0.0
        %289 = vmatprep.mubr.f32.mxu0 0.0
        %290 = vmatmul.mubr.f32.gmra.mrb[0].mxu0 %v201
        %v291 = vpop.f32.mrb[0].mxu0
        %v292 = vadd.f32 %v223, %v291
        %v293 = vpop.f32.mrb[0].mxu0
        %294 = vdwg.mxu0
        %295 = vst [vmem:[%s200] sm:$0xff] %v292
        %s296 = sand.u32 %s97, 1
        %s297 = scalar_lea.sflag [#allocation4], %s296
        %s298 = sand.u32 %s97, 1
        %s299 = smul.addr %s298, 8
        %s300 = scalar_lea.vmem [#allocation7], %s299
        // Predicated region
        $region41: #{tpu_custom_call.1} parent=31 // pred_check
          %p301 = pneg %p107
        $region42: #{tpu_custom_call.1} parent=31 // pred_check_branch
          %303 = sbr.rel (%p301) target = $region44
        $region43: #{tpu_custom_call.1} parent=31 // pred_region
          %s305 = ssub.s32 128, 128
          %306 = vsyncadd %s297, %s305
          %s307 = smul.addr %s21, 128
          %s308 = scalar_lea.hbm %s3, %s307
          %s310 = sshll.u32 %s300, 4
          %s311 = int_to_ptr.vmem [resolvable:$true] %s310
          %313 = dma.vmem_to_hbm [thread:$0]  %s311, 128, %s308, %s297
        $region44: #{tpu_custom_call.1} parent=31 // pred_fallthru
          _
      $region32: #{tpu_custom_call.1} parent=5 // pred_fallthru
        _
      %p314 = scmp.le.s32.totalorder 2, %s16
      // Predicated region
      $region45: #{tpu_custom_call.1} parent=5 // pred_check
        %p315 = pneg %p314
      $region46: #{tpu_custom_call.1} parent=5 // pred_check_branch
        %317 = sbr.rel (%p315) target = $region48
      $region47: #{tpu_custom_call.1} parent=5 // pred_region
        %s318 = ssub.s32 %s16, 2
        // Predicated region
        $region49: #{tpu_custom_call.1} parent=47 // pred_check
          %p319 = pneg %p113
        $region50: #{tpu_custom_call.1} parent=47 // pred_check_branch
          %321 = sbr.rel (%p319) target = $region52
        $region51: #{tpu_custom_call.1} parent=47 // pred_region
          %s322 = sand.u32 %s98, 1
          %s323 = scalar_lea.sflag [#allocation4], %s322
          %s324 = sand.u32 %s98, 1
          %s325 = smul.addr %s324, 8
          %s326 = scalar_lea.vmem [#allocation7], %s325
          %327 = dma.done %s323, 128
        $region52: #{tpu_custom_call.1} parent=47 // pred_fallthru
          _
      $region48: #{tpu_custom_call.1} parent=5 // pred_fallthru
        _
    $region6: #{tpu_custom_call.1} parent=1 // loop_footer
      %s20 = sadd.s32 1, %s16
    $region7: #{tpu_custom_call.1} parent=1 // loop_footer_branch
      %15 = sbr.rel target = $region3
    $region8: #{tpu_custom_call.1} parent=1 // loop_exit
      _
    %328 = vsyncpa [#allocation3], 1
    %s329 = scalar_lea.sflag [#allocation3], 1
    %330 = vsyncpa %s329, 1
    %331 = vsyncpa [#allocation6], 1
    %332 = vsyncpa [#allocation4], 1
    %s333 = scalar_lea.sflag [#allocation4], 1
    %334 = vsyncpa %s333, 1

</llo_original>
